<compile_context>
chip_gen: v7x
topology: tpu7x:2x2x1
jax: 0.10.0
libtpu: 0.0.40
codegen_flags: <defaults>
</compile_context>

<pallas_src>
import functools

import jax
import jax.numpy as jnp
from jax import lax
from jax.experimental import pallas as pl
from jax.experimental.pallas import tpu as pltpu

LANES = 128
MAX_ROW_TILE = 4096   # rows per step -> 4096*128*4B = 2 MiB per f32 input tile


def _zero_acc_kernel(pred_ref, target_ref, mism_ref, *, thresh, row_tile,
                     valid_rows_last):
    """Accumulate per-lane counts of (pred > 0) != (target <= thresh)."""
    i = pl.program_id(0)
    groups = row_tile // 8

    @pl.when(i == 0)
    def _init():
        mism_ref[...] = jnp.zeros_like(mism_ref)

    # Compare in the native input dtype (exact for f32; bf16 stays on the
    # bf16 VALU on v6e/v7x).  XOR counts mismatches -> saves the final NOT.
    p = pred_ref[...]
    t = target_ref[...]
    mism = (p > 0) != (t <= thresh)

    last = pl.num_programs(0) - 1

    @pl.when(i < last)
    def _steady():
        # Mask-free steady state: sublane-fold the tile into the single
        # vreg-shaped (8, 128) accumulator with pure VPU adds.
        folded = jnp.sum(mism.astype(jnp.int32).reshape(groups, 8, LANES),
                         axis=0)
        mism_ref[...] += folded

    @pl.when(i == last)
    def _edge():
        # Only the last block can contain rows past the end of the array
        # (Pallas edge-block padding): mask them by in-block row index.
        row_ids = lax.broadcasted_iota(jnp.int32, (row_tile, LANES), 0)
        valid = row_ids < valid_rows_last
        folded = jnp.sum(
            (mism & valid).astype(jnp.int32).reshape(groups, 8, LANES),
            axis=0)
        mism_ref[...] += folded


def zero_accuracy(pred, target, thresh=0.0):
    """Pallas implementation of ZeroAccuracy.forward. Returns a scalar f32."""
    assert pred.shape == target.shape, (pred.shape, target.shape)
    n = pred.size
    if n == 0:
        # torch.mean of an empty tensor is NaN.
        return jnp.float32(jnp.nan)

    pred_f = pred.reshape(-1)
    target_f = target.reshape(-1)

    rows = n // LANES            # 128-aligned prefix goes through the kernel
    n_main = rows * LANES
    tail = n - n_main

    matches = jnp.float32(0.0)

    if rows > 0:
        if tail:
            # Unaligned case: one slice copy of the aligned prefix (the tail
            # is handled below without materializing a padded copy).
            pred2d = pred_f[:n_main].reshape(rows, LANES)
            target2d = target_f[:n_main].reshape(rows, LANES)
        else:
            # Typical case: metadata-only reshape, fully zero-copy.
            pred2d = pred_f.reshape(rows, LANES)
            target2d = target_f.reshape(rows, LANES)

        # Tall lane-dense tiles; row count multiple of 8 (sublane constraint).
        row_tile = min(MAX_ROW_TILE, ((rows + 7) // 8) * 8)
        steps = pl.cdiv(rows, row_tile)
        valid_rows_last = rows - (steps - 1) * row_tile

        kernel = functools.partial(
            _zero_acc_kernel,
            thresh=float(thresh),
            row_tile=row_tile,
            valid_rows_last=valid_rows_last,
        )

        mism_lanes = pl.pallas_call(
            kernel,
            out_shape=jax.ShapeDtypeStruct((8, LANES), jnp.int32),
            grid_spec=pltpu.PrefetchScalarGridSpec(
                num_scalar_prefetch=0,
                grid=(steps,),
                in_specs=[
                    pl.BlockSpec((row_tile, LANES), lambda i: (i, 0)),
                    pl.BlockSpec((row_tile, LANES), lambda i: (i, 0)),
                ],
                # Same block every step -> VMEM-resident accumulator.
                out_specs=pl.BlockSpec((8, LANES), lambda i: (0, 0)),
            ),
            compiler_params=pltpu.CompilerParams(
                dimension_semantics=("arbitrary",),
                vmem_limit_bytes=64 * 1024 * 1024,
            ),
        )(pred2d, target2d)

        # Exact int32 counts; f32 cast is exact up to 2**24 (metric-grade).
        mismatches = jnp.sum(mism_lanes).astype(jnp.float32)
        matches = jnp.float32(n_main) - mismatches

    if tail:
        p_t = pred_f[n_main:]
        t_t = target_f[n_main:]
        matches = matches + jnp.sum(
            ((p_t > 0) == (t_t <= thresh)).astype(jnp.float32))

    return matches / jnp.float32(n)


def zero_accuracy_ref(pred, target, thresh=0.0):
    zero_pred = (pred > 0).astype(jnp.float32)
    zero_target = (target <= thresh).astype(jnp.float32)
    acc = (zero_pred == zero_target).astype(jnp.float32)
    return jnp.mean(acc)


if __name__ == "__main__":
    key = jax.random.PRNGKey(0)
    k1, k2, k3, k4 = jax.random.split(key, 4)

    # Small NCHW-shaped logits / targets (lane-aligned fast path).
    pred = jax.random.normal(k1, (2, 4, 16, 16), dtype=jnp.float32)
    target = jax.random.normal(k2, (2, 4, 16, 16), dtype=jnp.float32)
    out = jax.block_until_ready(zero_accuracy(pred, target, thresh=0.0))
    ref = zero_accuracy_ref(pred, target, thresh=0.0)
    assert abs(float(out) - float(ref)) < 1e-6, (float(out), float(ref))

    # Unaligned element count: exercises the edge-block mask + tail path.
    pred_u = jax.random.normal(k3, (5, 251), dtype=jnp.float32)
    target_u = jax.random.normal(k4, (5, 251), dtype=jnp.float32)
    out_u = jax.block_until_ready(zero_accuracy(pred_u, target_u, thresh=0.1))
    ref_u = zero_accuracy_ref(pred_u, target_u, thresh=0.1)
    assert abs(float(out_u) - float(ref_u)) < 1e-6, (float(out_u), float(ref_u))

    print("KERNEL_OK")
</pallas_src>

<mosaic_0001>
module attributes {stable_mosaic.version = 11 : i64} {
  func.func @_zero_acc_kernel(%arg0: i32, %arg1: memref<16x128xf32, #tpu.memory_space<vmem>>, %arg2: memref<16x128xf32, #tpu.memory_space<vmem>>, %arg3: memref<8x128xi32, #tpu.memory_space<vmem>>) attributes {dimension_semantics = [#tpu.dimension_semantics<arbitrary>], iteration_bounds = array<i64: 1>, scalar_prefetch = 0 : i64, scratch_operands = 0 : i64, tpu.core_type = #tpu.core_type<tc>, window_params = [{transform_indices = @transform_0, window_bounds = array<i64: 16, 128>}, {transform_indices = @transform_1, window_bounds = array<i64: 16, 128>}, {pipeline_mode = #tpu.pipeline_mode<synchronous>, transform_indices = @transform_2, window_bounds = array<i64: 8, 128>}]} {
    %c0_i32 = arith.constant 0 : i32
    %0 = arith.cmpi eq, %arg0, %c0_i32 : i32
    %1 = arith.extui %0 : i1 to i32
    %c0_i32_0 = arith.constant 0 : i32
    %2 = arith.cmpi ne, %1, %c0_i32_0 : i32
    scf.if %2 {
      %c0_i32_9 = arith.constant 0 : i32
      %16 = vector.broadcast %c0_i32_9 : i32 to vector<8x128xi32>
      %c0_10 = arith.constant 0 : index
      %c0_11 = arith.constant 0 : index
      %17 = vector.load %arg3[%c0_10, %c0_11] : memref<8x128xi32, #tpu.memory_space<vmem>>, vector<8x128xi32>
      tpu.vector_store %arg3[%c0_10, %c0_11], %16 {strides = array<i32>} : memref<8x128xi32, #tpu.memory_space<vmem>>, vector<8x128xi32>,
    } else {
    }
    %c0 = arith.constant 0 : index
    %c0_1 = arith.constant 0 : index
    %3 = vector.load %arg1[%c0, %c0_1] : memref<16x128xf32, #tpu.memory_space<vmem>>, vector<16x128xf32>
    %c0_2 = arith.constant 0 : index
    %c0_3 = arith.constant 0 : index
    %4 = vector.load %arg2[%c0_2, %c0_3] : memref<16x128xf32, #tpu.memory_space<vmem>>, vector<16x128xf32>
    %cst = arith.constant 0.000000e+00 : f32
    %5 = vector.broadcast %cst : f32 to vector<16x128xf32>
    %6 = arith.cmpf ogt, %3, %5 : vector<16x128xf32>
    %cst_4 = arith.constant 0.000000e+00 : f32
    %7 = vector.broadcast %cst_4 : f32 to vector<16x128xf32>
    %8 = arith.cmpf ole, %4, %7 : vector<16x128xf32>
    %9 = arith.xori %6, %8 : vector<16x128xi1>
    %c0_i32_5 = arith.constant 0 : i32
    %10 = arith.cmpi slt, %arg0, %c0_i32_5 : i32
    %11 = arith.extui %10 : i1 to i32
    %c0_i32_6 = arith.constant 0 : i32
    %12 = arith.cmpi ne, %11, %c0_i32_6 : i32
    scf.if %12 {
      %16 = arith.extui %9 : vector<16x128xi1> to vector<16x128xi32>
      %17 = vector.shape_cast %16 : vector<16x128xi32> to vector<2x8x128xi32>
      %cst_9 = arith.constant dense<0> : vector<8x128xi32>
      %18 = vector.multi_reduction <add>, %17, %cst_9 [0] : vector<2x8x128xi32> to vector<8x128xi32>
      %c0_10 = arith.constant 0 : index
      %c0_11 = arith.constant 0 : index
      %19 = vector.load %arg3[%c0_10, %c0_11] : memref<8x128xi32, #tpu.memory_space<vmem>>, vector<8x128xi32>
      %20 = arith.addi %19, %18 : vector<8x128xi32>
      %c0_12 = arith.constant 0 : index
      %c0_13 = arith.constant 0 : index
      %21 = vector.load %arg3[%c0_12, %c0_13] : memref<8x128xi32, #tpu.memory_space<vmem>>, vector<8x128xi32>
      tpu.vector_store %arg3[%c0_12, %c0_13], %20 {strides = array<i32>} : memref<8x128xi32, #tpu.memory_space<vmem>>, vector<8x128xi32>,
    } else {
    }
    %c0_i32_7 = arith.constant 0 : i32
    %13 = arith.cmpi eq, %arg0, %c0_i32_7 : i32
    %14 = arith.extui %13 : i1 to i32
    %c0_i32_8 = arith.constant 0 : i32
    %15 = arith.cmpi ne, %14, %c0_i32_8 : i32
    scf.if %15 {
      %16 = tpu.iota {dimensions = array<i32: 0>} : vector<16x128xi32>
      %c16_i32 = arith.constant 16 : i32
      %17 = vector.broadcast %c16_i32 : i32 to vector<16x128xi32>
      %18 = arith.cmpi slt, %16, %17 : vector<16x128xi32>
      %19 = arith.andi %9, %18 : vector<16x128xi1>
      %20 = arith.extui %19 : vector<16x128xi1> to vector<16x128xi32>
      %21 = vector.shape_cast %20 : vector<16x128xi32> to vector<2x8x128xi32>
      %cst_9 = arith.constant dense<0> : vector<8x128xi32>
      %22 = vector.multi_reduction <add>, %21, %cst_9 [0] : vector<2x8x128xi32> to vector<8x128xi32>
      %c0_10 = arith.constant 0 : index
      %c0_11 = arith.constant 0 : index
      %23 = vector.load %arg3[%c0_10, %c0_11] : memref<8x128xi32, #tpu.memory_space<vmem>>, vector<8x128xi32>
      %24 = arith.addi %23, %22 : vector<8x128xi32>
      %c0_12 = arith.constant 0 : index
      %c0_13 = arith.constant 0 : index
      %25 = vector.load %arg3[%c0_12, %c0_13] : memref<8x128xi32, #tpu.memory_space<vmem>>, vector<8x128xi32>
      tpu.vector_store %arg3[%c0_12, %c0_13], %24 {strides = array<i32>} : memref<8x128xi32, #tpu.memory_space<vmem>>, vector<8x128xi32>,
    } else {
    }
    return
  }
  func.func @transform_0(%arg0: i32) -> (i32, i32) {
    %c0_i32 = arith.constant 0 : i32
    %c0_i32_0 = arith.constant 0 : i32
    return %arg0, %c0_i32 : i32, i32
  }
  func.func @transform_1(%arg0: i32) -> (i32, i32) {
    %c0_i32 = arith.constant 0 : i32
    %c0_i32_0 = arith.constant 0 : i32
    return %arg0, %c0_i32 : i32, i32
  }
  func.func @transform_2(%arg0: i32) -> (i32, i32) {
    %c0_i32 = arith.constant 0 : i32
    %c0_i32_0 = arith.constant 0 : i32
    %c0_i32_1 = arith.constant 0 : i32
    return %c0_i32, %c0_i32_0 : i32, i32
  }
}

</mosaic_0001>

<llo_original>
// kernel: tpu_custom_call.1
$region0: #{tpu_custom_call.1}
  #allocation0 [shape = 'u32[]', space=smem, size = 0x4, offset = 0x4, fixed_abs, tag = 'smem constant byte address 0x4 - core index']
  #allocation1 [shape = 'u32[144,128]{1,0:T(1,128)}', space=vmem, size = 0x12000, scoped, tag = 'internal scratch']
  %s0 = inlined_call_operand.hbm [shape: f32[16,128], index: 0, kind: input, shape index: {}]
  %s1 = inlined_call_operand.hbm [shape: f32[16,128], index: 1, kind: input, shape index: {}]
  %s2 = inlined_call_operand.hbm [shape: s32[8,128], index: 2, kind: output, shape index: {}]
  %s3 = sld [smem:[#allocation0]]
  $region38: #{tpu_custom_call.1} parent=0
    _
  %s5 = ssub.s32 1, %s3
  %s6 = scalar_select 0, %s5, %s3
  $region1: #{tpu_custom_call.1} parent=0
    #allocation2 [shape = 'u8[8192]{0}', space=vmem, size = 0x2000, scoped, tag = 'input window, operand 0, single buffered']
    #allocation3 [shape = 's32[1]{0}', space=sflag, size = 0x4, scoped, tag = 'scoped memory for tpu_custom_call.1']
    #allocation4 [shape = 's32[1]{0}', space=sflag, size = 0x4, scoped, tag = 'scoped memory for tpu_custom_call.1']
    #allocation5 [shape = 'u8[8192]{0}', space=vmem, size = 0x2000, scoped, tag = 'input window, operand 1, single buffered']
    #allocation6 [shape = 's32[1]{0}', space=sflag, size = 0x4, scoped, tag = 'scoped memory for tpu_custom_call.1']
    #allocation7 [shape = 'u8[4096]{0}', space=vmem, size = 0x1000, scoped, tag = 'output window, operand 0, single buffered']
    %7 = vsyncpa [#allocation3], 0
    %8 = vsyncpa [#allocation6], 0
    %9 = vsyncpa [#allocation4], 0
    // Predicated region
    $region2: #{tpu_custom_call.1} parent=1 // pred_check
      _
    $region3: #{tpu_custom_call.1} parent=1 // pred_check_branch
      %11 = sbr.rel (0) target = $region5
    $region4: #{tpu_custom_call.1} parent=1 // pred_region
      %s13 = ssub.s32 256, 256
      %14 = vsyncadd [#allocation3], %s13
      %s15 = sshll.u32 [#allocation2], 4
      %s16 = int_to_ptr.vmem [resolvable:$true] %s15
      %21 = dma.hbm_to_vmem [thread:$0]  %s0, 256, %s16, [#allocation3], 128, 128, 8
    $region5: #{tpu_custom_call.1} parent=1 // pred_fallthru
      _
    // Predicated region
    $region6: #{tpu_custom_call.1} parent=1 // pred_check
      _
    $region7: #{tpu_custom_call.1} parent=1 // pred_check_branch
      %23 = sbr.rel (0) target = $region9
    $region8: #{tpu_custom_call.1} parent=1 // pred_region
      %s25 = ssub.s32 256, 256
      %26 = vsyncadd [#allocation6], %s25
      %s27 = sshll.u32 [#allocation5], 4
      %s28 = int_to_ptr.vmem [resolvable:$true] %s27
      %33 = dma.hbm_to_vmem [thread:$0]  %s1, 256, %s28, [#allocation6], 128, 128, 8
    $region9: #{tpu_custom_call.1} parent=1 // pred_fallthru
      _
    // Predicated region
    $region10: #{tpu_custom_call.1} parent=1 // pred_check
      _
    $region11: #{tpu_custom_call.1} parent=1 // pred_check_branch
      %35 = sbr.rel (0) target = $region13
    $region12: #{tpu_custom_call.1} parent=1 // pred_region
      %36 = dma.done [#allocation3], 256
    $region13: #{tpu_custom_call.1} parent=1 // pred_fallthru
      _
    // Predicated region
    $region14: #{tpu_custom_call.1} parent=1 // pred_check
      _
    $region15: #{tpu_custom_call.1} parent=1 // pred_check_branch
      %38 = sbr.rel (0) target = $region17
    $region16: #{tpu_custom_call.1} parent=1 // pred_region
      %39 = dma.done [#allocation6], 256
    $region17: #{tpu_custom_call.1} parent=1 // pred_fallthru
      _
    %p40 = scmp.eq.s32.totalorder 0, 0
    // Predicated region
    $region18: #{tpu_custom_call.1} parent=1 // pred_check
      %p41 = pneg %p40
    $region19: #{tpu_custom_call.1} parent=1 // pred_check_branch
      %43 = sbr.rel (%p41) target = $region21
    $region20: #{tpu_custom_call.1} parent=1 // pred_region
      %44 = vst [vmem:[#allocation7] sm:$0xff] 0
    $region21: #{tpu_custom_call.1} parent=1 // pred_fallthru
      _
    %v45 = vld [vmem:[#allocation2] sm:$0xff]
    %v46 = vld [vmem:[#allocation2 + $0x8] sm:$0xff]
    %v47 = vld [vmem:[#allocation5] sm:$0xff]
    %v48 = vld [vmem:[#allocation5 + $0x8] sm:$0xff]
    %vm49 = vcmp.gt.f32.partialorder %v45, 0.0
    %vm50 = vcmp.gt.f32.partialorder %v46, 0.0
    %vm51 = vcmp.le.f32.partialorder %v47, 0.0
    %vm52 = vcmp.le.f32.partialorder %v48, 0.0
    %vm53 = vmxor %vm49, %vm51
    %vm54 = vmxor %vm50, %vm52
    %p55 = scmp.lt.s32.totalorder 0, 0
    // Predicated region
    $region22: #{tpu_custom_call.1} parent=1 // pred_check
      %p56 = pneg %p55
    $region23: #{tpu_custom_call.1} parent=1 // pred_check_branch
      %58 = sbr.rel (%p56) target = $region25
    $region24: #{tpu_custom_call.1} parent=1 // pred_region
      %v59 = vsel %vm53, 1, 0
      %v60 = vsel %vm54, 1, 0
      %v61 = vadd.s32 %v59, %v60
      %v62 = vld [vmem:[#allocation7] sm:$0xff]
      %v63 = vadd.s32 %v62, %v61
      %64 = vst [vmem:[#allocation7] sm:$0xff] %v63
    $region25: #{tpu_custom_call.1} parent=1 // pred_fallthru
      _
    // Predicated region
    $region26: #{tpu_custom_call.1} parent=1 // pred_check
      %p65 = pneg %p40
    $region27: #{tpu_custom_call.1} parent=1 // pred_check_branch
      %67 = sbr.rel (%p65) target = $region29
    $region28: #{tpu_custom_call.1} parent=1 // pred_region
      %v68 = vlaneseq
      %v69 = vshrl.u32 %v68, 7
      %v70 = vadd.s32 %v69, 8
      %vm71 = vcmp.lt.s32.totalorder %v69, 16
      %vm72 = vcmp.lt.s32.totalorder %v70, 16
      %vm73 = vmand %vm53, %vm71
      %vm74 = vmand %vm54, %vm72
      %v75 = vsel %vm73, 1, 0
      %v76 = vsel %vm74, 1, 0
      %v77 = vadd.s32 %v75, %v76
      %v78 = vld [vmem:[#allocation7] sm:$0xff]
      %v79 = vadd.s32 %v78, %v77
      %80 = vst [vmem:[#allocation7] sm:$0xff] %v79
    $region29: #{tpu_custom_call.1} parent=1 // pred_fallthru
      _
    // Predicated region
    $region30: #{tpu_custom_call.1} parent=1 // pred_check
      _
    $region31: #{tpu_custom_call.1} parent=1 // pred_check_branch
      %82 = sbr.rel (0) target = $region33
    $region32: #{tpu_custom_call.1} parent=1 // pred_region
      %s84 = ssub.s32 128, 128
      %85 = vsyncadd [#allocation4], %s84
      %s87 = sshll.u32 [#allocation7], 4
      %s88 = int_to_ptr.vmem [resolvable:$true] %s87
      %90 = dma.vmem_to_hbm [thread:$0]  %s88, 128, %s2, [#allocation4]
    $region33: #{tpu_custom_call.1} parent=1 // pred_fallthru
      _
    // Predicated region
    $region34: #{tpu_custom_call.1} parent=1 // pred_check
      _
    $region35: #{tpu_custom_call.1} parent=1 // pred_check_branch
      %92 = sbr.rel (0) target = $region37
    $region36: #{tpu_custom_call.1} parent=1 // pred_region
      %93 = dma.done [#allocation4], 128
    $region37: #{tpu_custom_call.1} parent=1 // pred_fallthru
      _
    %94 = vsyncpa [#allocation3], 1
    %95 = vsyncpa [#allocation6], 1
    %96 = vsyncpa [#allocation4], 1

</llo_original>
